<compile_context>
chip_gen: v7x
topology: tpu7x:2x2x1
jax: 0.10.0
libtpu: 0.0.40
codegen_flags: <defaults>
</compile_context>

<pallas_src>
import math
from functools import partial

import jax
import jax.numpy as jnp
from jax.experimental import pallas as pl
from jax.experimental.pallas import tpu as pltpu


def _multihead_kernel(*refs, n_layers):
    """All heads, all layers, one invocation.

    refs = (x_ref, w0_ref, b0_ref, ..., w_{L-1}_ref, b_{L-1}_ref, out_ref)
    Each w_i is head-folded (layer 0) or block-diagonal (deeper layers), so
    every layer is a single lane-dense MXU matmul + bias (+ ReLU if hidden).
    The Python loop unrolls at trace time (n_layers is static).
    """
    x_ref = refs[0]
    out_ref = refs[-1]
    wb = refs[1:-1]

    act = x_ref[...].astype(jnp.float32)                        # (B, D0)
    for i in range(n_layers):
        w = wb[2 * i][...]                                      # (N_in, N_out)
        b = wb[2 * i + 1][...]                                  # (1, N_out)
        act = jnp.dot(act, w, preferred_element_type=jnp.float32) + b
        if i < n_layers - 1:
            act = jnp.maximum(act, 0.0)                         # ReLU on hidden layers only
    out_ref[...] = act.astype(out_ref.dtype)                    # one lane-dense store


def _fold_params(weights, biases):
    """Fold per-head weight stacks into single lane-dense matrices.

    Lane layout is head-major: lane index = h * D_i + d_i at every layer, so
    layer-0 folding and the block-diagonal deeper layers are consistent.
    """
    H, D0, D1 = weights[0].shape
    # Layer 0: every head consumes the same input -> fold heads into N (lanes).
    w0 = jnp.transpose(weights[0], (1, 0, 2)).reshape(D0, H * D1)
    b0 = biases[0].reshape(1, H * D1)
    folded = [(w0, b0)]
    # Deeper layers act per head -> block-diagonal so one matmul covers all heads.
    for w, b in zip(weights[1:], biases[1:]):
        _, din, dout = w.shape
        eye = jnp.eye(H, dtype=w.dtype)
        wbd = jnp.einsum("hg,hpq->hpgq", eye, w).reshape(H * din, H * dout)
        folded.append((wbd, b.reshape(1, H * dout)))
    return folded


def multihead_forward(x, weights, biases):
    """
    x:        [B, D0]
    weights:  list, weights[i] is [H, D_i, D_{i+1}]  (per-head, already [in, out])
    biases:   list, biases[i]  is [H, D_{i+1}]
    returns:  [B, H, D_last]  (== torch.stack([head(x) for head in heads], dim=1))
    """
    B, _ = x.shape
    H = weights[0].shape[0]
    D_last = weights[-1].shape[-1]
    n_layers = len(weights)

    folded = _fold_params(weights, biases)

    # Pad the final layer's N so the single output store is full-lane (multiple of 128).
    n_out = H * D_last
    n_out_pad = ((n_out + 127) // 128) * 128
    if n_out_pad != n_out:
        w_last, b_last = folded[-1]
        w_last = jnp.pad(w_last, ((0, 0), (0, n_out_pad - n_out)))
        b_last = jnp.pad(b_last, ((0, 0), (0, n_out_pad - n_out)))
        folded[-1] = (w_last, b_last)

    flat_params = [p for wb in folded for p in wb]

    vmem = pl.BlockSpec(memory_space=pltpu.MemorySpace.VMEM)
    out_flat = pl.pallas_call(
        partial(_multihead_kernel, n_layers=n_layers),
        out_shape=jax.ShapeDtypeStruct((B, n_out_pad), x.dtype),
        in_specs=[vmem] * (1 + len(flat_params)),
        out_specs=vmem,
    )(x, *flat_params)

    return out_flat[:, :n_out].reshape(B, H, D_last)


def init_multihead_params(key, n_heads, layers_config):
    """Xavier-normal (gain=sqrt(2) == calculate_gain('relu')) weights, bias=0.01."""
    gain = math.sqrt(2.0)
    weights, biases = [], []
    for i in range(1, len(layers_config)):
        d_in, d_out = layers_config[i - 1], layers_config[i]
        key, sub = jax.random.split(key)
        std = gain * math.sqrt(2.0 / (d_in + d_out))
        w = std * jax.random.normal(sub, (n_heads, d_in, d_out), dtype=jnp.float32)
        b = jnp.full((n_heads, d_out), 0.01, dtype=jnp.float32)
        weights.append(w)
        biases.append(b)
    return weights, biases


def multihead_reference(x, weights, biases):
    """Pure-JAX reference for sanity checking."""
    outs = []
    n_layers = len(weights)
    for h in range(weights[0].shape[0]):
        act = x
        for i in range(n_layers):
            act = act @ weights[i][h] + biases[i][h]
            if i < n_layers - 1:
                act = jnp.maximum(act, 0.0)
        outs.append(act)
    return jnp.stack(outs, axis=1)


if __name__ == "__main__":
    key = jax.random.PRNGKey(0)

    n_heads = 3
    layers_config = [32, 64, 16]   # D0=32 input features, one hidden layer of 64, output 16
    batch = 8

    key, kx = jax.random.split(key)
    x = jax.random.normal(kx, (batch, layers_config[0]), dtype=jnp.float32)

    weights, biases = init_multihead_params(key, n_heads, layers_config)

    out = jax.jit(multihead_forward)(x, weights, biases)
    out = jax.block_until_ready(out)

    ref = multihead_reference(x, weights, biases)
    assert out.shape == (batch, n_heads, layers_config[-1]), out.shape
    assert jnp.allclose(out, ref, atol=1e-4, rtol=1e-4), "mismatch vs reference"

    print("KERNEL_OK")
</pallas_src>

<mosaic_0001>
module attributes {stable_mosaic.version = 11 : i64} {
  func.func @_multihead_kernel(%arg0: memref<8x32xf32, #tpu.memory_space<vmem>>, %arg1: memref<32x192xf32, #tpu.memory_space<vmem>>, %arg2: memref<1x192xf32, #tpu.memory_space<vmem>>, %arg3: memref<192x128xf32, #tpu.memory_space<vmem>>, %arg4: memref<1x128xf32, #tpu.memory_space<vmem>>, %arg5: memref<8x128xf32, #tpu.memory_space<vmem>>) attributes {dimension_semantics = [], scalar_prefetch = 0 : i64, scratch_operands = 0 : i64, tpu.core_type = #tpu.core_type<tc>} {
    %c0 = arith.constant 0 : index
    %c0_0 = arith.constant 0 : index
    %0 = vector.load %arg0[%c0, %c0_0] : memref<8x32xf32, #tpu.memory_space<vmem>>, vector<8x32xf32>
    %c0_1 = arith.constant 0 : index
    %c0_2 = arith.constant 0 : index
    %1 = vector.load %arg1[%c0_1, %c0_2] : memref<32x192xf32, #tpu.memory_space<vmem>>, vector<32x192xf32>
    %c0_3 = arith.constant 0 : index
    %c0_4 = arith.constant 0 : index
    %2 = vector.load %arg2[%c0_3, %c0_4] : memref<1x192xf32, #tpu.memory_space<vmem>>, vector<1x192xf32>
    %cst = arith.constant dense<0.000000e+00> : vector<8x192xf32>
    %3 = tpu.matmul %0, %1, %cst {dimension_numbers = #tpu.dot_dimension_numbers<[1], [0], [0], [1], [0, 0, 1, 1], [], []>} : vector<8x32xf32>, vector<32x192xf32>, vector<8x192xf32> -> vector<8x192xf32>
    %4 = vector.broadcast %2 : vector<1x192xf32> to vector<8x192xf32>
    %5 = arith.addf %3, %4 : vector<8x192xf32>
    %cst_5 = arith.constant 0.000000e+00 : f32
    %6 = vector.broadcast %cst_5 : f32 to vector<8x192xf32>
    %7 = arith.maximumf %5, %6 : vector<8x192xf32>
    %c0_6 = arith.constant 0 : index
    %c0_7 = arith.constant 0 : index
    %8 = vector.load %arg3[%c0_6, %c0_7] : memref<192x128xf32, #tpu.memory_space<vmem>>, vector<192x128xf32>
    %c0_8 = arith.constant 0 : index
    %c0_9 = arith.constant 0 : index
    %9 = vector.load %arg4[%c0_8, %c0_9] : memref<1x128xf32, #tpu.memory_space<vmem>>, vector<1x128xf32>
    %cst_10 = arith.constant dense<0.000000e+00> : vector<8x128xf32>
    %10 = tpu.matmul %7, %8, %cst_10 {dimension_numbers = #tpu.dot_dimension_numbers<[1], [0], [0], [1], [0, 0, 1, 1], [], []>} : vector<8x192xf32>, vector<192x128xf32>, vector<8x128xf32> -> vector<8x128xf32>
    %11 = vector.broadcast %9 : vector<1x128xf32> to vector<8x128xf32>
    %12 = arith.addf %10, %11 : vector<8x128xf32>
    %c0_11 = arith.constant 0 : index
    %c0_12 = arith.constant 0 : index
    %13 = vector.load %arg5[%c0_11, %c0_12] : memref<8x128xf32, #tpu.memory_space<vmem>>, vector<8x128xf32>
    tpu.vector_store %arg5[%c0_11, %c0_12], %12 {strides = array<i32>} : memref<8x128xf32, #tpu.memory_space<vmem>>, vector<8x128xf32>,
    return
  }
}

</mosaic_0001>

<llo_original>
// kernel: multihead_forward.1
$region0: #{multihead_forward.1}
  #allocation0 [shape = 'u32[]', space=smem, size = 0x4, offset = 0x4, fixed_abs, tag = 'smem constant byte address 0x4 - core index']
  #allocation1 [shape = 'u32[144,128]{1,0:T(1,128)}', space=vmem, size = 0x12000, scoped, tag = 'internal scratch']
  %s0 = inlined_call_operand.vmem [shape: f32[8,32], index: 0, kind: input, shape index: {}]
  %s1 = inlined_call_operand.vmem [shape: f32[32,192], index: 1, kind: input, shape index: {}]
  %s2 = inlined_call_operand.vmem [shape: f32[1,192], index: 2, kind: input, shape index: {}]
  %s3 = inlined_call_operand.vmem [shape: f32[192,128], index: 3, kind: input, shape index: {}]
  %s4 = inlined_call_operand.vmem [shape: f32[1,128], index: 4, kind: input, shape index: {}]
  %s5 = inlined_call_operand.vmem [shape: f32[8,128], index: 5, kind: output, shape index: {}]
  %s6 = sld [smem:[#allocation0]]
  $region30: #{multihead_forward.1} parent=0
    _
  %s8 = ssub.s32 1, %s6
  %s9 = scalar_select 0, %s8, %s6
  // Predicated region
  $region2: #{multihead_forward.1} parent=0 // pred_check
    _
  $region3: #{multihead_forward.1} parent=0 // pred_check_branch
    %11 = sbr.rel (0) target = $region5
  $region4: #{multihead_forward.1} parent=0 // pred_region
    _
  $region5: #{multihead_forward.1} parent=0 // pred_fallthru
    _
  // Predicated region
  $region6: #{multihead_forward.1} parent=0 // pred_check
    _
  $region7: #{multihead_forward.1} parent=0 // pred_check_branch
    %13 = sbr.rel (0) target = $region9
  $region8: #{multihead_forward.1} parent=0 // pred_region
    _
  $region9: #{multihead_forward.1} parent=0 // pred_fallthru
    _
  // Predicated region
  $region10: #{multihead_forward.1} parent=0 // pred_check
    _
  $region11: #{multihead_forward.1} parent=0 // pred_check_branch
    %15 = sbr.rel (0) target = $region13
  $region12: #{multihead_forward.1} parent=0 // pred_region
    _
  $region13: #{multihead_forward.1} parent=0 // pred_fallthru
    _
  // Predicated region
  $region14: #{multihead_forward.1} parent=0 // pred_check
    _
  $region15: #{multihead_forward.1} parent=0 // pred_check_branch
    %17 = sbr.rel (0) target = $region17
  $region16: #{multihead_forward.1} parent=0 // pred_region
    _
  $region17: #{multihead_forward.1} parent=0 // pred_fallthru
    _
  // Predicated region
  $region18: #{multihead_forward.1} parent=0 // pred_check
    _
  $region19: #{multihead_forward.1} parent=0 // pred_check_branch
    %19 = sbr.rel (0) target = $region21
  $region20: #{multihead_forward.1} parent=0 // pred_region
    _
  $region21: #{multihead_forward.1} parent=0 // pred_fallthru
    _
  %v20 = vld [vmem:[%s0] sm:$0xff]
  %v21 = vld [vmem:[%s1] sm:$0xff]
  %v22 = vld [vmem:[%s1 + $0x8] sm:$0xff]
  %v23 = vld [vmem:[%s1 + $0x10] sm:$0xff]
  %v24 = vld [vmem:[%s1 + $0x18] sm:$0xff]
  %v25 = vld [vmem:[%s1 + $0x20] sm:$0xff]
  %v26 = vld [vmem:[%s1 + $0x28] sm:$0xff]
  %v27 = vld [vmem:[%s1 + $0x30] sm:$0xff]
  %v28 = vld [vmem:[%s1 + $0x38] sm:$0xff]
  %v29 = vld [vmem:[%s2] sm:$0x3]
  %v31 = vlaneseq
  %v32 = vshrl.u32 %v31, 7
  %v33 = vsub.s32 0, %v32
  %v34 = vrot.slane %v29, %v33
  %v35 = vlaneseq
  %v36 = vshrl.u32 %v35, 7
  %v37 = vsub.s32 1, %v36
  %v38 = vrot.slane %v29, %v37
  %vm41 = vcmask 261120
  %v43 = vsel %vm41, %v20, 0
  %45 = vmatprep.subr.mxu0 %v22
  %46 = vmatpush1.msra.mxu0 %v21
  %47 = vmatprep.subr.mxu0 %v24
  %48 = vmatpush1.msra.mxu0 %v23
  %49 = vmatprep.subr.mxu0 %v26
  %50 = vmatpush1.msra.mxu0 %v25
  %51 = vmatprep.subr.mxu0 %v28
  %52 = vmatpush1.msra.mxu0 %v27
  %53 = vmatprep.subr.mxu0 0.0
  %54 = vmatpush1.msra.mxu0 0.0
  %55 = vmatprep.subr.mxu0 0.0
  %56 = vmatpush1.msra.mxu0 0.0
  %57 = vmatprep.subr.mxu0 0.0
  %58 = vmatpush1.msra.mxu0 0.0
  %59 = vmatprep.subr.mxu0 0.0
  %60 = vmatpush1.msra.mxu0 0.0
  %61 = vmatprep.subr.mxu0 0.0
  %62 = vmatpush1.msra.mxu0 0.0
  %63 = vmatprep.subr.mxu0 0.0
  %64 = vmatpush1.msra.mxu0 0.0
  %65 = vmatprep.subr.mxu0 0.0
  %66 = vmatpush1.msra.mxu0 0.0
  %67 = vmatprep.subr.mxu0 0.0
  %68 = vmatpush1.msra.mxu0 0.0
  %69 = vmatprep.subr.mxu0 0.0
  %70 = vmatpush1.msra.mxu0 0.0
  %71 = vmatprep.subr.mxu0 0.0
  %72 = vmatpush1.msra.mxu0 0.0
  %73 = vmatprep.subr.mxu0 0.0
  %74 = vmatpush1.msra.mxu0 0.0
  %75 = vmatprep.subr.mxu0 0.0
  %76 = vmatpush1.msra.mxu0 0.0
  %77 = vmatprep.subr.mxu0 0.0
  %78 = vmatpush1.msra.mxu0 0.0
  %79 = vmatprep.subr.mxu0 0.0
  %80 = vmatpush1.msra.mxu0 0.0
  %81 = vmatprep.subr.mxu0 0.0
  %82 = vmatpush1.msra.mxu0 0.0
  %83 = vmatprep.subr.mxu0 0.0
  %84 = vmatpush1.msra.mxu0 0.0
  %85 = vmatprep.subr.mxu0 0.0
  %86 = vmatpush1.msra.mxu0 0.0
  %87 = vmatprep.subr.mxu0 0.0
  %88 = vmatpush1.msra.mxu0 0.0
  %89 = vmatprep.subr.mxu0 0.0
  %90 = vmatpush1.msra.mxu0 0.0
  %91 = vmatprep.subr.mxu0 0.0
  %92 = vmatpush1.msra.mxu0 0.0
  %93 = vmatprep.subr.mxu0 0.0
  %94 = vmatpush1.msra.mxu0 0.0
  %95 = vmatprep.subr.mxu0 0.0
  %96 = vmatpush1.msra.mxu0 0.0
  %97 = vmatprep.subr.mxu0 0.0
  %98 = vmatpush1.msra.mxu0 0.0
  %99 = vmatprep.subr.mxu0 0.0
  %100 = vmatpush1.msra.mxu0 0.0
  %101 = vmatprep.subr.mxu0 0.0
  %102 = vmatpush1.msra.mxu0 0.0
  %103 = vmatprep.subr.mxu0 0.0
  %104 = vmatpush1.msra.mxu0 0.0
  %105 = vmatprep.subr.mxu0 0.0
  %106 = vmatpush1.msra.mxu0 0.0
  %107 = vmatprep.subr.mxu0 0.0
  %108 = vmatpush1.msra.mxu0 0.0
  %109 = vmatprep.mubr.f32.mxu0 0.0
  %110 = vmatmul.mubr.f32.gmra.mrb[0].mxu0 %v43
  %v111 = vpop.f32.mrb[0].mxu0
  %v112 = vadd.f32 %v34, %v111
  %v113 = vpop.f32.mrb[0].mxu0
  %v114 = vadd.f32 %v38, %v113
  %115 = vdwg.mxu0
  %v116 = vmax.f32 %v112, 0.0
  %v117 = vmax.f32 %v114, 0.0
  %v118 = vld [vmem:[%s3] sm:$0xff]
  %v119 = vld [vmem:[%s3 + $0x8] sm:$0xff]
  %v120 = vld [vmem:[%s3 + $0x10] sm:$0xff]
  %v121 = vld [vmem:[%s3 + $0x18] sm:$0xff]
  %v122 = vld [vmem:[%s3 + $0x20] sm:$0xff]
  %v123 = vld [vmem:[%s3 + $0x28] sm:$0xff]
  %v124 = vld [vmem:[%s3 + $0x30] sm:$0xff]
  %v125 = vld [vmem:[%s3 + $0x38] sm:$0xff]
  %v126 = vld [vmem:[%s3 + $0x40] sm:$0xff]
  %v127 = vld [vmem:[%s3 + $0x48] sm:$0xff]
  %v128 = vld [vmem:[%s3 + $0x50] sm:$0xff]
  %v129 = vld [vmem:[%s3 + $0x58] sm:$0xff]
  %v130 = vld [vmem:[%s3 + $0x60] sm:$0xff]
  %v131 = vld [vmem:[%s3 + $0x68] sm:$0xff]
  %v132 = vld [vmem:[%s3 + $0x70] sm:$0xff]
  %v133 = vld [vmem:[%s3 + $0x78] sm:$0xff]
  %v134 = vld [vmem:[%s3 + $0x80] sm:$0xff]
  %v135 = vld [vmem:[%s3 + $0x88] sm:$0xff]
  %v136 = vld [vmem:[%s3 + $0x90] sm:$0xff]
  %v137 = vld [vmem:[%s3 + $0x98] sm:$0xff]
  %v138 = vld [vmem:[%s3 + $0xa0] sm:$0xff]
  %v139 = vld [vmem:[%s3 + $0xa8] sm:$0xff]
  %v140 = vld [vmem:[%s3 + $0xb0] sm:$0xff]
  %v141 = vld [vmem:[%s3 + $0xb8] sm:$0xff]
  %v142 = vld [vmem:[%s4] sm:$0x1]
  %v144 = vlaneseq
  %v145 = vshrl.u32 %v144, 7
  %v146 = vsub.s32 0, %v145
  %v147 = vrot.slane %v142, %v146
  %vm149 = vcmask 523264
  %v151 = vsel %vm149, %v117, 0
  %153 = vmatprep.subr.mxu0 0.0
  %154 = vmatpush1.msra.mxu0 %v118
  %155 = vmatprep.subr.mxu0 0.0
  %156 = vmatpush1.msra.mxu0 %v119
  %157 = vmatprep.subr.mxu0 0.0
  %158 = vmatpush1.msra.mxu0 %v120
  %159 = vmatprep.subr.mxu0 0.0
  %160 = vmatpush1.msra.mxu0 %v121
  %161 = vmatprep.subr.mxu0 0.0
  %162 = vmatpush1.msra.mxu0 %v122
  %163 = vmatprep.subr.mxu0 0.0
  %164 = vmatpush1.msra.mxu0 %v123
  %165 = vmatprep.subr.mxu0 0.0
  %166 = vmatpush1.msra.mxu0 %v124
  %167 = vmatprep.subr.mxu0 0.0
  %168 = vmatpush1.msra.mxu0 %v125
  %169 = vmatprep.subr.mxu0 0.0
  %170 = vmatpush1.msra.mxu0 %v126
  %171 = vmatprep.subr.mxu0 0.0
  %172 = vmatpush1.msra.mxu0 %v127
  %173 = vmatprep.subr.mxu0 0.0
  %174 = vmatpush1.msra.mxu0 %v128
  %175 = vmatprep.subr.mxu0 0.0
  %176 = vmatpush1.msra.mxu0 %v129
  %177 = vmatprep.subr.mxu0 0.0
  %178 = vmatpush1.msra.mxu0 %v130
  %179 = vmatprep.subr.mxu0 0.0
  %180 = vmatpush1.msra.mxu0 %v131
  %181 = vmatprep.subr.mxu0 0.0
  %182 = vmatpush1.msra.mxu0 %v132
  %183 = vmatprep.subr.mxu0 0.0
  %184 = vmatpush1.msra.mxu0 %v133
  %185 = vmatprep.subr.mxu0 0.0
  %186 = vmatpush1.msra.mxu0 %v134
  %187 = vmatprep.subr.mxu0 0.0
  %188 = vmatpush1.msra.mxu0 %v135
  %189 = vmatprep.subr.mxu0 0.0
  %190 = vmatpush1.msra.mxu0 %v136
  %191 = vmatprep.subr.mxu0 0.0
  %192 = vmatpush1.msra.mxu0 %v137
  %193 = vmatprep.subr.mxu0 0.0
  %194 = vmatpush1.msra.mxu0 %v138
  %195 = vmatprep.subr.mxu0 0.0
  %196 = vmatpush1.msra.mxu0 %v139
  %197 = vmatprep.subr.mxu0 0.0
  %198 = vmatpush1.msra.mxu0 %v140
  %199 = vmatprep.subr.mxu0 0.0
  %200 = vmatpush1.msra.mxu0 %v141
  %201 = vmatprep.subr.mxu0 0.0
  %202 = vmatpush1.msra.mxu0 0.0
  %203 = vmatprep.subr.mxu0 0.0
  %204 = vmatpush1.msra.mxu0 0.0
  %205 = vmatprep.subr.mxu0 0.0
  %206 = vmatpush1.msra.mxu0 0.0
  %207 = vmatprep.subr.mxu0 0.0
  %208 = vmatpush1.msra.mxu0 0.0
  %209 = vmatprep.subr.mxu0 0.0
  %210 = vmatpush1.msra.mxu0 0.0
  %211 = vmatprep.subr.mxu0 0.0
  %212 = vmatpush1.msra.mxu0 0.0
  %213 = vmatprep.subr.mxu0 0.0
  %214 = vmatpush1.msra.mxu0 0.0
  %215 = vmatprep.subr.mxu0 0.0
  %216 = vmatpush1.msra.mxu0 0.0
  %217 = vmatprep.mubr.f32.mxu0 %v151
  %218 = vmatmul.mubr.f32.gmra.mrb[0].mxu0 %v116
  %v219 = vpop.f32.mrb[0].mxu0
  %v220 = vadd.f32 %v147, %v219
  %v221 = vpop.f32.mrb[0].mxu0
  %222 = vdwg.mxu0
  %223 = vst [vmem:[%s5] sm:$0xff] %v220
  // Predicated region
  $region22: #{multihead_forward.1} parent=0 // pred_check
    _
  $region23: #{multihead_forward.1} parent=0 // pred_check_branch
    %225 = sbr.rel (0) target = $region25
  $region24: #{multihead_forward.1} parent=0 // pred_region
    _
  $region25: #{multihead_forward.1} parent=0 // pred_fallthru
    _
  // Predicated region
  $region26: #{multihead_forward.1} parent=0 // pred_check
    _
  $region27: #{multihead_forward.1} parent=0 // pred_check_branch
    %227 = sbr.rel (0) target = $region29
  $region28: #{multihead_forward.1} parent=0 // pred_region
    _
  $region29: #{multihead_forward.1} parent=0 // pred_fallthru
    _

</llo_original>
